<compile_context>
chip_gen: v6e
topology: v6e:2x2x1
jax: 0.10.0
libtpu: 0.0.40
codegen_flags: <defaults>
</compile_context>

<pallas_src>
import math

import jax
import jax.numpy as jnp
from jax.experimental import pallas as pl
from jax.experimental.pallas import tpu as pltpu


def _se_kernel(x_ref, w1_ref, b1_ref, w2_ref, b2_ref, o_ref):
    # x_ref block: [1, C, HW]  (C on sublanes, HW on lanes)
    x = x_ref[0]
    xf = x.astype(jnp.float32)

    # Global average pool over spatial (cross-lane reduce, XLU).
    pooled = jnp.mean(xf, axis=-1, keepdims=True)                    # [C, 1]

    # Squeeze: 1x1 conv == mat-vec.  W1: [C/r, C], b1: [C/r, 1]
    h = jnp.dot(w1_ref[...], pooled,
                preferred_element_type=jnp.float32) + b1_ref[...]    # [C/r, 1]
    h = jnp.maximum(h, 0.0)                                          # ReLU

    # Excite: W2: [C, C/r], b2: [C, 1]
    z = jnp.dot(w2_ref[...], h,
                preferred_element_type=jnp.float32) + b2_ref[...]    # [C, 1]
    gate = 1.0 / (1.0 + jnp.exp(-z))                                 # sigmoid

    # Per-channel gating, broadcast across the lane (spatial) axis.
    o_ref[0] = (xf * gate).astype(o_ref.dtype)


def se_layer(x, params):
    """x: [B, C, H, W]. params = (w1 [C/r, C], b1 [C/r], w2 [C, C/r], b2 [C])."""
    w1, b1, w2, b2 = params
    B, C, H, W = x.shape
    Cr = w1.shape[0]
    HW = H * W
    assert w1.shape == (Cr, C) and w2.shape == (C, Cr)
    assert b1.shape[-1] == Cr and b2.shape[-1] == C

    x2 = x.reshape(B, C, HW)  # free reshape; HW lands on the lane axis

    # VMEM budget: (in + out) blocks double-buffered + resident weights + slack.
    itemsize = jnp.dtype(x.dtype).itemsize
    blk_bytes = C * HW * itemsize
    needed = 2 * 2 * blk_bytes + 4 * (w1.size + b1.size + w2.size + b2.size) + (2 << 20)
    vmem_limit = int(min(max(needed, 16 << 20), 48 << 20))  # fits v7x 64 MiB VMEM

    out = pl.pallas_call(
        _se_kernel,
        out_shape=jax.ShapeDtypeStruct((B, C, HW), x.dtype),
        grid_spec=pltpu.PrefetchScalarGridSpec(
            num_scalar_prefetch=0,
            grid=(B,),
            in_specs=[
                pl.BlockSpec((1, C, HW), lambda b: (b, 0, 0)),  # x plane (streamed)
                pl.BlockSpec((Cr, C), lambda b: (0, 0)),        # W1 (resident)
                pl.BlockSpec((Cr, 1), lambda b: (0, 0)),        # b1
                pl.BlockSpec((C, Cr), lambda b: (0, 0)),        # W2
                pl.BlockSpec((C, 1), lambda b: (0, 0)),         # b2
            ],
            out_specs=pl.BlockSpec((1, C, HW), lambda b: (b, 0, 0)),
        ),
        compiler_params=pltpu.CompilerParams(
            dimension_semantics=("parallel",),
            vmem_limit_bytes=vmem_limit,
        ),
    )(x2, w1, b1.reshape(Cr, 1), w2, b2.reshape(C, 1))

    return out.reshape(B, C, H, W)


def init_params(key, channel, reduction=16, dtype=jnp.float32):
    """Mimics nn.Conv2d default init (uniform +/- 1/sqrt(fan_in)); 1x1 conv
    weights stored as dense [out, in] matrices."""
    cr = channel // reduction
    assert cr >= 1, "channel must be >= reduction"
    ks = jax.random.split(key, 4)
    bnd1 = 1.0 / math.sqrt(channel)
    w1 = jax.random.uniform(ks[0], (cr, channel), dtype, -bnd1, bnd1)
    b1 = jax.random.uniform(ks[1], (cr,), dtype, -bnd1, bnd1)
    bnd2 = 1.0 / math.sqrt(cr)
    w2 = jax.random.uniform(ks[2], (channel, cr), dtype, -bnd2, bnd2)
    b2 = jax.random.uniform(ks[3], (channel,), dtype, -bnd2, bnd2)
    return w1, b1, w2, b2


def _reference(x, params):
    w1, b1, w2, b2 = params
    y = jnp.mean(x.astype(jnp.float32), axis=(2, 3))          # [B, C]
    h = jnp.maximum(y @ w1.T + b1, 0.0)                       # [B, C/r]
    g = 1.0 / (1.0 + jnp.exp(-(h @ w2.T + b2)))               # [B, C]
    return (x.astype(jnp.float32) * g[:, :, None, None]).astype(x.dtype)


if __name__ == "__main__":
    batch, channel, height, width = 2, 128, 16, 16
    reduction = 16

    key = jax.random.PRNGKey(0)
    kx, kp = jax.random.split(key)
    x = jax.random.normal(kx, (batch, channel, height, width), jnp.float32)
    params = init_params(kp, channel, reduction)

    out = se_layer(x, params)
    out = jax.block_until_ready(out)

    ref = _reference(x, params)
    assert out.shape == x.shape
    assert jnp.allclose(out, ref, atol=1e-5, rtol=1e-5), "mismatch vs reference"

    print("KERNEL_OK")
</pallas_src>

<mosaic_0001>
module attributes {stable_mosaic.version = 11 : i64} {
  func.func @_se_kernel(%arg0: i32, %arg1: memref<1x128x256xf32, #tpu.memory_space<vmem>>, %arg2: memref<8x128xf32, #tpu.memory_space<vmem>>, %arg3: memref<8x1xf32, #tpu.memory_space<vmem>>, %arg4: memref<128x8xf32, #tpu.memory_space<vmem>>, %arg5: memref<128x1xf32, #tpu.memory_space<vmem>>, %arg6: memref<1x128x256xf32, #tpu.memory_space<vmem>>) attributes {dimension_semantics = [#tpu.dimension_semantics<parallel>], iteration_bounds = array<i64: 2>, scalar_prefetch = 0 : i64, scratch_operands = 0 : i64, tpu.core_type = #tpu.core_type<tc>, window_params = [{transform_indices = @transform_0, window_bounds = array<i64: 1, 128, 256>}, {pipeline_mode = #tpu.pipeline_mode<synchronous>, transform_indices = @transform_1, window_bounds = array<i64: 8, 128>}, {pipeline_mode = #tpu.pipeline_mode<synchronous>, transform_indices = @transform_2, window_bounds = array<i64: 8, 1>}, {pipeline_mode = #tpu.pipeline_mode<synchronous>, transform_indices = @transform_3, window_bounds = array<i64: 128, 8>}, {pipeline_mode = #tpu.pipeline_mode<synchronous>, transform_indices = @transform_4, window_bounds = array<i64: 128, 1>}, {transform_indices = @transform_5, window_bounds = array<i64: 1, 128, 256>}]} {
    %c0 = arith.constant 0 : index
    %c0_0 = arith.constant 0 : index
    %c0_1 = arith.constant 0 : index
    %0 = vector.load %arg1[%c0, %c0_0, %c0_1] : memref<1x128x256xf32, #tpu.memory_space<vmem>>, vector<1x128x256xf32>
    %1 = vector.shape_cast %0 : vector<1x128x256xf32> to vector<128x256xf32>
    %cst = arith.constant dense<0.000000e+00> : vector<128xf32>
    %2 = vector.multi_reduction <add>, %1, %cst [1] : vector<128x256xf32> to vector<128xf32>
    %3 = vector.shape_cast %2 : vector<128xf32> to vector<128x1xf32>
    %cst_2 = arith.constant 2.560000e+02 : f32
    %4 = vector.broadcast %cst_2 : f32 to vector<128x1xf32>
    %5 = arith.divf %3, %4 : vector<128x1xf32>
    %c0_3 = arith.constant 0 : index
    %c0_4 = arith.constant 0 : index
    %6 = vector.load %arg2[%c0_3, %c0_4] : memref<8x128xf32, #tpu.memory_space<vmem>>, vector<8x128xf32>
    %cst_5 = arith.constant dense<0.000000e+00> : vector<8x1xf32>
    %7 = tpu.matmul %6, %5, %cst_5 {dimension_numbers = #tpu.dot_dimension_numbers<[1], [0], [0], [1], [0, 0, 1, 1], [], []>} : vector<8x128xf32>, vector<128x1xf32>, vector<8x1xf32> -> vector<8x1xf32>
    %c0_6 = arith.constant 0 : index
    %c0_7 = arith.constant 0 : index
    %8 = vector.load %arg3[%c0_6, %c0_7] : memref<8x1xf32, #tpu.memory_space<vmem>>, vector<8x1xf32>
    %9 = arith.addf %7, %8 : vector<8x1xf32>
    %cst_8 = arith.constant 0.000000e+00 : f32
    %10 = vector.broadcast %cst_8 : f32 to vector<8x1xf32>
    %11 = arith.maximumf %9, %10 : vector<8x1xf32>
    %c0_9 = arith.constant 0 : index
    %c0_10 = arith.constant 0 : index
    %12 = vector.load %arg4[%c0_9, %c0_10] : memref<128x8xf32, #tpu.memory_space<vmem>>, vector<128x8xf32>
    %cst_11 = arith.constant dense<0.000000e+00> : vector<128x1xf32>
    %13 = tpu.matmul %12, %11, %cst_11 {dimension_numbers = #tpu.dot_dimension_numbers<[1], [0], [0], [1], [0, 0, 1, 1], [], []>} : vector<128x8xf32>, vector<8x1xf32>, vector<128x1xf32> -> vector<128x1xf32>
    %c0_12 = arith.constant 0 : index
    %c0_13 = arith.constant 0 : index
    %14 = vector.load %arg5[%c0_12, %c0_13] : memref<128x1xf32, #tpu.memory_space<vmem>>, vector<128x1xf32>
    %15 = arith.addf %13, %14 : vector<128x1xf32>
    %cst_14 = arith.constant 0.000000e+00 : f32
    %16 = vector.broadcast %cst_14 : f32 to vector<128x1xf32>
    %17 = arith.subf %16, %15 : vector<128x1xf32>
    %18 = math.exp %17 : vector<128x1xf32>
    %cst_15 = arith.constant 1.000000e+00 : f32
    %19 = vector.broadcast %cst_15 : f32 to vector<128x1xf32>
    %20 = arith.addf %19, %18 : vector<128x1xf32>
    %cst_16 = arith.constant 1.000000e+00 : f32
    %21 = vector.broadcast %cst_16 : f32 to vector<128x1xf32>
    %22 = arith.divf %21, %20 : vector<128x1xf32>
    %23 = vector.broadcast %22 : vector<128x1xf32> to vector<128x256xf32>
    %24 = arith.mulf %1, %23 : vector<128x256xf32>
    %c0_17 = arith.constant 0 : index
    %c0_18 = arith.constant 0 : index
    %c0_19 = arith.constant 0 : index
    %25 = vector.load %arg6[%c0_17, %c0_18, %c0_19] : memref<1x128x256xf32, #tpu.memory_space<vmem>>, vector<1x128x256xf32>
    %26 = vector.shape_cast %25 : vector<1x128x256xf32> to vector<128x256xf32>
    %27 = vector.shape_cast %24 : vector<128x256xf32> to vector<1x128x256xf32>
    tpu.vector_store %arg6[%c0_17, %c0_18, %c0_19], %27 {strides = array<i32>} : memref<1x128x256xf32, #tpu.memory_space<vmem>>, vector<1x128x256xf32>,
    return
  }
  func.func @transform_0(%arg0: i32) -> (i32, i32, i32) {
    %c0_i32 = arith.constant 0 : i32
    %c0_i32_0 = arith.constant 0 : i32
    %c0_i32_1 = arith.constant 0 : i32
    return %arg0, %c0_i32, %c0_i32_0 : i32, i32, i32
  }
  func.func @transform_1(%arg0: i32) -> (i32, i32) {
    %c0_i32 = arith.constant 0 : i32
    %c0_i32_0 = arith.constant 0 : i32
    %c0_i32_1 = arith.constant 0 : i32
    return %c0_i32, %c0_i32_0 : i32, i32
  }
  func.func @transform_2(%arg0: i32) -> (i32, i32) {
    %c0_i32 = arith.constant 0 : i32
    %c0_i32_0 = arith.constant 0 : i32
    %c0_i32_1 = arith.constant 0 : i32
    return %c0_i32, %c0_i32_0 : i32, i32
  }
  func.func @transform_3(%arg0: i32) -> (i32, i32) {
    %c0_i32 = arith.constant 0 : i32
    %c0_i32_0 = arith.constant 0 : i32
    %c0_i32_1 = arith.constant 0 : i32
    return %c0_i32, %c0_i32_0 : i32, i32
  }
  func.func @transform_4(%arg0: i32) -> (i32, i32) {
    %c0_i32 = arith.constant 0 : i32
    %c0_i32_0 = arith.constant 0 : i32
    %c0_i32_1 = arith.constant 0 : i32
    return %c0_i32, %c0_i32_0 : i32, i32
  }
  func.func @transform_5(%arg0: i32) -> (i32, i32, i32) {
    %c0_i32 = arith.constant 0 : i32
    %c0_i32_0 = arith.constant 0 : i32
    %c0_i32_1 = arith.constant 0 : i32
    return %arg0, %c0_i32, %c0_i32_0 : i32, i32, i32
  }
}

</mosaic_0001>

<llo_original>
// kernel: tpu_custom_call.1
$region0: #{tpu_custom_call.1}
  #allocation0 [shape = 'u32[]', space=smem, size = 0x4, offset = 0x4, fixed_abs, tag = 'smem constant byte address 0x4 - core index']
  #allocation1 [shape = 'u32[144,128]{1,0:T(1,128)}', space=vmem, size = 0x12000, scoped, tag = 'internal scratch']
  %s0 = inlined_call_operand.hbm [shape: f32[2,128,256], index: 0, kind: input, shape index: {}]
  %s1 = inlined_call_operand.vmem [shape: f32[8,128], index: 1, kind: input, shape index: {}]
  %s2 = inlined_call_operand.vmem [shape: f32[8,1], index: 2, kind: input, shape index: {}]
  %s3 = inlined_call_operand.vmem [shape: f32[128,8], index: 3, kind: input, shape index: {}]
  %s4 = inlined_call_operand.vmem [shape: f32[128,1], index: 4, kind: input, shape index: {}]
  %s5 = inlined_call_operand.hbm [shape: f32[2,128,256], index: 5, kind: output, shape index: {}]
  %s6 = sld [smem:[#allocation0]]
  $region57: #{tpu_custom_call.1} parent=0
    _
  %s8 = ssub.s32 1, %s6
  %s9 = scalar_select 0, %s8, %s6
  $region1: #{tpu_custom_call.1} parent=0
    #allocation2 [shape = 'u8[262144]{0}', space=vmem, size = 0x40000, scoped, tag = 'input window, operand 0']
    #allocation3 [shape = 's32[2]{0}', space=sflag, size = 0x8, scoped, tag = 'scoped memory for tpu_custom_call.1']
    #allocation4 [shape = 's32[2]{0}', space=sflag, size = 0x8, scoped, tag = 'scoped memory for tpu_custom_call.1']
    #allocation5 [shape = 'u8[262144]{0}', space=vmem, size = 0x40000, scoped, tag = 'output window, operand 0']
    %10 = vsyncpa [#allocation3], 0
    %s11 = scalar_lea.sflag [#allocation3], 1
    %12 = vsyncpa %s11, 0
    %13 = vsyncpa [#allocation4], 0
    %s14 = scalar_lea.sflag [#allocation4], 1
    %15 = vsyncpa %s14, 0
    loop: start=0, step=1, limit=4
    $region2: #{tpu_custom_call.1} parent=1 // loop_pre_header
      _
    $region3: #{tpu_custom_call.1} parent=1 // loop_header
      %s17 = sphi 0, %s21
      %p18 = scmp.ge.s32.totalorder %s17, 4
      %s27 = sphi 0, %s29
      %s30 = sphi 0, %s27
      %s31 = sphi 0, %s30
      %s47 = sphi 0, %s31
      %s51 = sphi 0, %s51
      %s53 = sphi 0, %s51
      %s54 = sphi 0, %s53
      %s68 = sphi 0, %s54
      %s72 = sphi 0, %s72
      %s74 = sphi 0, %s72
      %s75 = sphi 0, %s74
      %s89 = sphi 0, %s75
      %s93 = sphi 0, %s93
      %s95 = sphi 0, %s93
      %s96 = sphi 0, %s95
      %s110 = sphi 0, %s96
      %s114 = sphi 0, %s114
      %s116 = sphi 0, %s114
      %s117 = sphi 0, %s116
      %s131 = sphi 0, %s117
      %s137 = sphi 0, %s139
      %s140 = sphi 0, %s137
      %s141 = sphi 0, %s140
      %s157 = sphi 0, %s141
    $region4: #{tpu_custom_call.1} parent=1 // loop_header_branch
      %20 = sbr.rel (%p18) target = $region8
    $region5: #{tpu_custom_call.1} parent=1 // loop_body
      %s22 = ssub.s32 %s17, 1
      %s23 = ssub.s32 %s17, 2
      %s24 = sadd.s32 %s17, 1
      %s25 = ssub.s32 %s17, %s24
      %p26 = scmp.eq.s32.totalorder %s25, 0
      %s28 = sadd.s32 %s27, 1
      %s29 = scalar_select %p26, %s27, %s28
      %p32 = pneg %p26
      %p33 = scmp.eq.s32.totalorder %s17, 1
      %p34 = por %p32, %p33
      %p35 = scmp.ne.s32.totalorder %s27, %s30
      %p36 = scmp.eq.s32.totalorder %s17, 0
      %p37 = por %p35, %p36
      %p38 = scmp.ne.s32.totalorder %s27, %s30
      %p39 = scmp.eq.s32.totalorder %s22, 1
      %p40 = por %p38, %p39
      %p41 = scmp.ne.s32.totalorder %s30, %s31
      %p42 = scmp.eq.s32.totalorder %s22, 0
      %p43 = por %p41, %p42
      %p44 = scmp.ne.s32.totalorder %s30, %s31
      %p45 = scmp.eq.s32.totalorder %s23, 1
      %p46 = por %p44, %p45
      %p48 = scmp.ne.s32.totalorder %s31, %s47
      %p49 = scmp.eq.s32.totalorder %s23, 0
      %p50 = por %p48, %p49
      %s52 = sadd.s32 %s51, 1
      %p55 = scmp.eq.s32.totalorder %s17, 1
      %p56 = scmp.ne.s32.totalorder %s51, %s53
      %p57 = scmp.eq.s32.totalorder %s17, 0
      %p58 = por %p56, %p57
      %p59 = scmp.ne.s32.totalorder %s51, %s53
      %p60 = scmp.eq.s32.totalorder %s22, 1
      %p61 = por %p59, %p60
      %p62 = scmp.ne.s32.totalorder %s53, %s54
      %p63 = scmp.eq.s32.totalorder %s22, 0
      %p64 = por %p62, %p63
      %p65 = scmp.ne.s32.totalorder %s53, %s54
      %p66 = scmp.eq.s32.totalorder %s23, 1
      %p67 = por %p65, %p66
      %p69 = scmp.ne.s32.totalorder %s54, %s68
      %p70 = scmp.eq.s32.totalorder %s23, 0
      %p71 = por %p69, %p70
      %s73 = sadd.s32 %s72, 1
      %p76 = scmp.eq.s32.totalorder %s17, 1
      %p77 = scmp.ne.s32.totalorder %s72, %s74
      %p78 = scmp.eq.s32.totalorder %s17, 0
      %p79 = por %p77, %p78
      %p80 = scmp.ne.s32.totalorder %s72, %s74
      %p81 = scmp.eq.s32.totalorder %s22, 1
      %p82 = por %p80, %p81
      %p83 = scmp.ne.s32.totalorder %s74, %s75
      %p84 = scmp.eq.s32.totalorder %s22, 0
      %p85 = por %p83, %p84
      %p86 = scmp.ne.s32.totalorder %s74, %s75
      %p87 = scmp.eq.s32.totalorder %s23, 1
      %p88 = por %p86, %p87
      %p90 = scmp.ne.s32.totalorder %s75, %s89
      %p91 = scmp.eq.s32.totalorder %s23, 0
      %p92 = por %p90, %p91
      %s94 = sadd.s32 %s93, 1
      %p97 = scmp.eq.s32.totalorder %s17, 1
      %p98 = scmp.ne.s32.totalorder %s93, %s95
      %p99 = scmp.eq.s32.totalorder %s17, 0
      %p100 = por %p98, %p99
      %p101 = scmp.ne.s32.totalorder %s93, %s95
      %p102 = scmp.eq.s32.totalorder %s22, 1
      %p103 = por %p101, %p102
      %p104 = scmp.ne.s32.totalorder %s95, %s96
      %p105 = scmp.eq.s32.totalorder %s22, 0
      %p106 = por %p104, %p105
      %p107 = scmp.ne.s32.totalorder %s95, %s96
      %p108 = scmp.eq.s32.totalorder %s23, 1
      %p109 = por %p107, %p108
      %p111 = scmp.ne.s32.totalorder %s96, %s110
      %p112 = scmp.eq.s32.totalorder %s23, 0
      %p113 = por %p111, %p112
      %s115 = sadd.s32 %s114, 1
      %p118 = scmp.eq.s32.totalorder %s17, 1
      %p119 = scmp.ne.s32.totalorder %s114, %s116
      %p120 = scmp.eq.s32.totalorder %s17, 0
      %p121 = por %p119, %p120
      %p122 = scmp.ne.s32.totalorder %s114, %s116
      %p123 = scmp.eq.s32.totalorder %s22, 1
      %p124 = por %p122, %p123
      %p125 = scmp.ne.s32.totalorder %s116, %s117
      %p126 = scmp.eq.s32.totalorder %s22, 0
      %p127 = por %p125, %p126
      %p128 = scmp.ne.s32.totalorder %s116, %s117
      %p129 = scmp.eq.s32.totalorder %s23, 1
      %p130 = por %p128, %p129
      %p132 = scmp.ne.s32.totalorder %s117, %s131
      %p133 = scmp.eq.s32.totalorder %s23, 0
      %p134 = por %p132, %p133
      %s135 = ssub.s32 %s17, %s24
      %p136 = scmp.eq.s32.totalorder %s135, 0
      %s138 = sadd.s32 %s137, 1
      %s139 = scalar_select %p136, %s137, %s138
      %p142 = pneg %p136
      %p143 = scmp.eq.s32.totalorder %s17, 1
      %p144 = por %p142, %p143
      %p145 = scmp.ne.s32.totalorder %s137, %s140
      %p146 = scmp.eq.s32.totalorder %s17, 0
      %p147 = por %p145, %p146
      %p148 = scmp.ne.s32.totalorder %s137, %s140
      %p149 = scmp.eq.s32.totalorder %s22, 1
      %p150 = por %p148, %p149
      %p151 = scmp.ne.s32.totalorder %s140, %s141
      %p152 = scmp.eq.s32.totalorder %s22, 0
      %p153 = por %p151, %p152
      %p154 = scmp.ne.s32.totalorder %s140, %s141
      %p155 = scmp.eq.s32.totalorder %s23, 1
      %p156 = por %p154, %p155
      %p158 = scmp.ne.s32.totalorder %s141, %s157
      %p159 = scmp.eq.s32.totalorder %s23, 0
      %p160 = por %p158, %p159
      %p161 = scmp.le.s32.totalorder 1, %s17
      %p162 = scmp.lt.s32.totalorder %s17, 3
      %p163 = pnand %p161, %p162
      %p164 = pneg %p163
      // Predicated region
      $region9: #{tpu_custom_call.1} parent=5 // pred_check
        _
      $region10: #{tpu_custom_call.1} parent=5 // pred_check_branch
        %166 = sbr.rel (%p163) target = $region12
      $region11: #{tpu_custom_call.1} parent=5 // pred_region
        %s167 = ssub.s32 %s17, 1
        // Predicated region
        $region13: #{tpu_custom_call.1} parent=11 // pred_check
          %p168 = pneg %p64
        $region14: #{tpu_custom_call.1} parent=11 // pred_check_branch
          %170 = sbr.rel (%p168) target = $region16
        $region15: #{tpu_custom_call.1} parent=11 // pred_region
          _
        $region16: #{tpu_custom_call.1} parent=11 // pred_fallthru
          _
        // Predicated region
        $region17: #{tpu_custom_call.1} parent=11 // pred_check
          %p171 = pneg %p85
        $region18: #{tpu_custom_call.1} parent=11 // pred_check_branch
          %173 = sbr.rel (%p171) target = $region20
        $region19: #{tpu_custom_call.1} parent=11 // pred_region
          _
        $region20: #{tpu_custom_call.1} parent=11 // pred_fallthru
          _
        // Predicated region
        $region21: #{tpu_custom_call.1} parent=11 // pred_check
          %p174 = pneg %p106
        $region22: #{tpu_custom_call.1} parent=11 // pred_check_branch
          %176 = sbr.rel (%p174) target = $region24
        $region23: #{tpu_custom_call.1} parent=11 // pred_region
          _
        $region24: #{tpu_custom_call.1} parent=11 // pred_fallthru
          _
        // Predicated region
        $region25: #{tpu_custom_call.1} parent=11 // pred_check
          %p177 = pneg %p127
        $region26: #{tpu_custom_call.1} parent=11 // pred_check_branch
          %179 = sbr.rel (%p177) target = $region28
        $region27: #{tpu_custom_call.1} parent=11 // pred_region
          _
        $region28: #{tpu_custom_call.1} parent=11 // pred_fallthru
          _
      $region12: #{tpu_custom_call.1} parent=5 // pred_fallthru
        _
      %p180 = scmp.lt.s32.totalorder %s17, 2
      // Predicated region
      $region29: #{tpu_custom_call.1} parent=5 // pred_check
        %p181 = pneg %p180
      $region30: #{tpu_custom_call.1} parent=5 // pred_check_branch
        %183 = sbr.rel (%p181) target = $region32
      $region31: #{tpu_custom_call.1} parent=5 // pred_region
        // Predicated region
        $region33: #{tpu_custom_call.1} parent=31 // pred_check
          %p184 = pneg %p37
        $region34: #{tpu_custom_call.1} parent=31 // pred_check_branch
          %186 = sbr.rel (%p184) target = $region36
        $region35: #{tpu_custom_call.1} parent=31 // pred_region
          %s187 = sand.u32 %s27, 1
          %s188 = scalar_lea.sflag [#allocation3], %s187
          %s189 = sand.u32 %s27, 1
          %s190 = smul.addr %s189, 256
          %s191 = scalar_lea.vmem [#allocation2], %s190
          %s193 = ssub.s32 4096, 4096
          %194 = vsyncadd %s188, %s193
          %s195 = smul.addr %s17, 32
          %s196 = smul.addr %s195, 128
          %s197 = scalar_lea.hbm %s0, %s196
          %s198 = sshll.u32 %s191, 4
          %s199 = int_to_ptr.vmem [resolvable:$true] %s198
          %204 = dma.hbm_to_vmem [thread:$0]  %s197, 4096, %s199, %s188, 256, 256, 16
        $region36: #{tpu_custom_call.1} parent=31 // pred_fallthru
          _
      $region32: #{tpu_custom_call.1} parent=5 // pred_fallthru
        _
      %p205 = scmp.le.s32.totalorder 1, %s17
      %p206 = scmp.lt.s32.totalorder %s17, 3
      %p207 = pnand %p205, %p206
      %p208 = pneg %p207
      // Predicated region
      $region37: #{tpu_custom_call.1} parent=5 // pred_check
        _
      $region38: #{tpu_custom_call.1} parent=5 // pred_check_branch
        %210 = sbr.rel (%p207) target = $region40
      $region39: #{tpu_custom_call.1} parent=5 // pred_region
        %s211 = ssub.s32 %s17, 1
        %s212 = sand.u32 %s30, 1
        %s213 = scalar_lea.sflag [#allocation3], %s212
        %s214 = sand.u32 %s30, 1
        %s215 = smul.addr %s214, 256
        %s216 = scalar_lea.vmem [#allocation2], %s215
        // Predicated region
        $region41: #{tpu_custom_call.1} parent=39 // pred_check
          %p217 = pneg %p43
        $region42: #{tpu_custom_call.1} parent=39 // pred_check_branch
          %219 = sbr.rel (%p217) target = $region44
        $region43: #{tpu_custom_call.1} parent=39 // pred_region
          %220 = dma.done %s213, 4096
        $region44: #{tpu_custom_call.1} parent=39 // pred_fallthru
          _
        %s221 = sand.u32 %s30, 1
        %s222 = scalar_lea.sflag [#allocation3], %s221
        %s223 = sand.u32 %s30, 1
        %s224 = smul.addr %s223, 256
        %s225 = scalar_lea.vmem [#allocation2], %s224
        %p226 = pneg %p43
        %p227 = pneg %p40
        %p228 = pneg %p64
        %p229 = pneg %p61
        %p230 = pneg %p85
        %p231 = pneg %p82
        %p232 = pneg %p106
        %p233 = pneg %p103
        %p234 = pneg %p127
        %p235 = pneg %p124
        %p236 = pneg %p153
        %p237 = pneg %p150
        %s238 = sand.u32 %s140, 1
        %s239 = scalar_lea.sflag [#allocation4], %s238
        %s240 = sand.u32 %s140, 1
        %s241 = smul.addr %s240, 256
        %s242 = scalar_lea.vmem [#allocation5], %s241
        %v243 = vld [vmem:[%s216] sm:$0xff]
        %v244 = vld [vmem:[%s216 + $0x8] sm:$0xff]
        %v245 = vld [vmem:[%s216 + $0x10] sm:$0xff]
        %v246 = vld [vmem:[%s216 + $0x18] sm:$0xff]
        %v247 = vld [vmem:[%s216 + $0x20] sm:$0xff]
        %v248 = vld [vmem:[%s216 + $0x28] sm:$0xff]
        %v249 = vld [vmem:[%s216 + $0x30] sm:$0xff]
        %v250 = vld [vmem:[%s216 + $0x38] sm:$0xff]
        %v251 = vld [vmem:[%s216 + $0x40] sm:$0xff]
        %v252 = vld [vmem:[%s216 + $0x48] sm:$0xff]
        %v253 = vld [vmem:[%s216 + $0x50] sm:$0xff]
        %v254 = vld [vmem:[%s216 + $0x58] sm:$0xff]
        %v255 = vld [vmem:[%s216 + $0x60] sm:$0xff]
        %v256 = vld [vmem:[%s216 + $0x68] sm:$0xff]
        %v257 = vld [vmem:[%s216 + $0x70] sm:$0xff]
        %v258 = vld [vmem:[%s216 + $0x78] sm:$0xff]
        %v259 = vld [vmem:[%s216 + $0x80] sm:$0xff]
        %v260 = vld [vmem:[%s216 + $0x88] sm:$0xff]
        %v261 = vld [vmem:[%s216 + $0x90] sm:$0xff]
        %v262 = vld [vmem:[%s216 + $0x98] sm:$0xff]
        %v263 = vld [vmem:[%s216 + $0xa0] sm:$0xff]
        %v264 = vld [vmem:[%s216 + $0xa8] sm:$0xff]
        %v265 = vld [vmem:[%s216 + $0xb0] sm:$0xff]
        %v266 = vld [vmem:[%s216 + $0xb8] sm:$0xff]
        %v267 = vld [vmem:[%s216 + $0xc0] sm:$0xff]
        %v268 = vld [vmem:[%s216 + $0xc8] sm:$0xff]
        %v269 = vld [vmem:[%s216 + $0xd0] sm:$0xff]
        %v270 = vld [vmem:[%s216 + $0xd8] sm:$0xff]
        %v271 = vld [vmem:[%s216 + $0xe0] sm:$0xff]
        %v272 = vld [vmem:[%s216 + $0xe8] sm:$0xff]
        %v273 = vld [vmem:[%s216 + $0xf0] sm:$0xff]
        %v274 = vld [vmem:[%s216 + $0xf8] sm:$0xff]
        %v275 = vadd.f32 %v243, %v244
        %276 = vadd.xlane.f32.xlu0 %v275
        %v277 = vpop.xlane.xlu0 %276
        %v278 = vadd.f32 %v245, %v246
        %279 = vadd.xlane.f32.xlu0 %v278
        %v280 = vpop.xlane.xlu0 %279
        %v281 = vadd.f32 %v247, %v248
        %282 = vadd.xlane.f32.xlu0 %v281
        %v283 = vpop.xlane.xlu0 %282
        %v284 = vadd.f32 %v249, %v250
        %285 = vadd.xlane.f32.xlu0 %v284
        %v286 = vpop.xlane.xlu0 %285
        %v287 = vadd.f32 %v251, %v252
        %288 = vadd.xlane.f32.xlu0 %v287
        %v289 = vpop.xlane.xlu0 %288
        %v290 = vadd.f32 %v253, %v254
        %291 = vadd.xlane.f32.xlu0 %v290
        %v292 = vpop.xlane.xlu0 %291
        %v293 = vadd.f32 %v255, %v256
        %294 = vadd.xlane.f32.xlu0 %v293
        %v295 = vpop.xlane.xlu0 %294
        %v296 = vadd.f32 %v257, %v258
        %297 = vadd.xlane.f32.xlu0 %v296
        %v298 = vpop.xlane.xlu0 %297
        %v299 = vadd.f32 %v259, %v260
        %300 = vadd.xlane.f32.xlu0 %v299
        %v301 = vpop.xlane.xlu0 %300
        %v302 = vadd.f32 %v261, %v262
        %303 = vadd.xlane.f32.xlu0 %v302
        %v304 = vpop.xlane.xlu0 %303
        %v305 = vadd.f32 %v263, %v264
        %306 = vadd.xlane.f32.xlu0 %v305
        %v307 = vpop.xlane.xlu0 %306
        %v308 = vadd.f32 %v265, %v266
        %309 = vadd.xlane.f32.xlu0 %v308
        %v310 = vpop.xlane.xlu0 %309
        %v311 = vadd.f32 %v267, %v268
        %312 = vadd.xlane.f32.xlu0 %v311
        %v313 = vpop.xlane.xlu0 %312
        %v314 = vadd.f32 %v269, %v270
        %315 = vadd.xlane.f32.xlu0 %v314
        %v316 = vpop.xlane.xlu0 %315
        %v317 = vadd.f32 %v271, %v272
        %318 = vadd.xlane.f32.xlu0 %v317
        %v319 = vpop.xlane.xlu0 %318
        %v320 = vadd.f32 %v273, %v274
        %321 = vadd.xlane.f32.xlu0 %v320
        %v322 = vpop.xlane.xlu0 %321
        %v323 = vrcp.pop 256.0
        %v324 = vmul.f32 %v277, %v323
        %v325 = vmul.f32 %v280, %v323
        %v326 = vmul.f32 %v283, %v323
        %v327 = vmul.f32 %v286, %v323
        %v328 = vmul.f32 %v289, %v323
        %v329 = vmul.f32 %v292, %v323
        %v330 = vmul.f32 %v295, %v323
        %v331 = vmul.f32 %v298, %v323
        %v332 = vmul.f32 %v301, %v323
        %v333 = vmul.f32 %v304, %v323
        %v334 = vmul.f32 %v307, %v323
        %v335 = vmul.f32 %v310, %v323
        %v336 = vmul.f32 %v313, %v323
        %v337 = vmul.f32 %v316, %v323
        %v338 = vmul.f32 %v319, %v323
        %v339 = vmul.f32 %v322, %v323
        %v340 = vld [vmem:[%s1] sm:$0xff]
        %v341 = vld [vmem:[%s2] sm:$0xff]
        %342 = vmatprep.subr.mxu0 0.0
        %343 = vmatpush1.msra.mxu0 %v339
        %344 = vmatprep.subr.mxu0 0.0
        %345 = vmatpush1.msra.mxu0 %v338
        %346 = vmatprep.subr.mxu0 0.0
        %347 = vmatpush1.msra.mxu0 %v337
        %348 = vmatprep.subr.mxu0 0.0
        %349 = vmatpush1.msra.mxu0 %v336
        %350 = vmatprep.subr.mxu0 0.0
        %351 = vmatpush1.msra.mxu0 %v335
        %352 = vmatprep.subr.mxu0 0.0
        %353 = vmatpush1.msra.mxu0 %v334
        %354 = vmatprep.subr.mxu0 0.0
        %355 = vmatpush1.msra.mxu0 %v333
        %356 = vmatprep.subr.mxu0 0.0
        %357 = vmatpush1.msra.mxu0 %v332
        %358 = vmatprep.subr.mxu0 0.0
        %359 = vmatpush1.msra.mxu0 %v331
        %360 = vmatprep.subr.mxu0 0.0
        %361 = vmatpush1.msra.mxu0 %v330
        %362 = vmatprep.subr.mxu0 0.0
        %363 = vmatpush1.msra.mxu0 %v329
        %364 = vmatprep.subr.mxu0 0.0
        %365 = vmatpush1.msra.mxu0 %v328
        %366 = vmatprep.subr.mxu0 0.0
        %367 = vmatpush1.msra.mxu0 %v327
        %368 = vmatprep.subr.mxu0 0.0
        %369 = vmatpush1.msra.mxu0 %v326
        %370 = vmatprep.subr.mxu0 0.0
        %371 = vmatpush1.msra.mxu0 %v325
        %372 = vmatprep.subr.mxu0 0.0
        %373 = vmatpush1.msra.mxu0 %v324
        %374 = vmatprep.subr.mxu0 0.0
        %375 = vmatpush2.msra.mxu0 0.0
        %376 = vmatprep.subr.mxu0 0.0
        %377 = vmatpush2.msra.mxu0 0.0
        %378 = vmatprep.subr.mxu0 0.0
        %379 = vmatpush2.msra.mxu0 0.0
        %380 = vmatprep.subr.mxu0 0.0
        %381 = vmatpush2.msra.mxu0 0.0
        %382 = vmatprep.subr.mxu0 0.0
        %383 = vmatpush2.msra.mxu0 0.0
        %384 = vmatprep.subr.mxu0 0.0
        %385 = vmatpush2.msra.mxu0 0.0
        %386 = vmatprep.subr.mxu0 0.0
        %387 = vmatpush2.msra.mxu0 0.0
        %388 = vmatprep.subr.mxu0 0.0
        %389 = vmatpush2.msra.mxu0 0.0
        %390 = vmatprep.subr.mxu0 0.0
        %391 = vmatpush2.msra.mxu0 0.0
        %392 = vmatprep.subr.mxu0 0.0
        %393 = vmatpush2.msra.mxu0 0.0
        %394 = vmatprep.subr.mxu0 0.0
        %395 = vmatpush2.msra.mxu0 0.0
        %396 = vmatprep.subr.mxu0 0.0
        %397 = vmatpush2.msra.mxu0 0.0
        %398 = vmatprep.subr.mxu0 0.0
        %399 = vmatpush2.msra.mxu0 0.0
        %400 = vmatprep.subr.mxu0 0.0
        %401 = vmatpush2.msra.mxu0 0.0
        %402 = vmatprep.subr.mxu0 0.0
        %403 = vmatpush2.msra.mxu0 0.0
        %404 = vmatprep.subr.mxu0 0.0
        %405 = vmatpush2.msra.mxu0 0.0
        %406 = vmatprep.mubr.f32.mxu0 0.0
        %407 = vmatmul.mubr.f32.gmra.mxu0 %v340
        %v408 = vpop.f32.mrf.mxu0
        %v409 = vadd.f32 %v341, %v408
        %v410 = vpop.f32.mrf.mxu0
        %411 = vdwg.mxu0
        %v412 = vmax.f32 %v409, 0.0
        %v413 = vld [vmem:[%s3] sm:$0xff]
        %v414 = vld [vmem:[%s3 + $0x8] sm:$0xff]
        %v415 = vld [vmem:[%s3 + $0x10] sm:$0xff]
        %v416 = vld [vmem:[%s3 + $0x18] sm:$0xff]
        %v417 = vld [vmem:[%s3 + $0x20] sm:$0xff]
        %v418 = vld [vmem:[%s3 + $0x28] sm:$0xff]
        %v419 = vld [vmem:[%s3 + $0x30] sm:$0xff]
        %v420 = vld [vmem:[%s3 + $0x38] sm:$0xff]
        %v421 = vld [vmem:[%s3 + $0x40] sm:$0xff]
        %v422 = vld [vmem:[%s3 + $0x48] sm:$0xff]
        %v423 = vld [vmem:[%s3 + $0x50] sm:$0xff]
        %v424 = vld [vmem:[%s3 + $0x58] sm:$0xff]
        %v425 = vld [vmem:[%s3 + $0x60] sm:$0xff]
        %v426 = vld [vmem:[%s3 + $0x68] sm:$0xff]
        %v427 = vld [vmem:[%s3 + $0x70] sm:$0xff]
        %v428 = vld [vmem:[%s3 + $0x78] sm:$0xff]
        %v429 = vld [vmem:[%s4] sm:$0xff]
        %v430 = vld [vmem:[%s4 + $0x8] sm:$0xff]
        %v431 = vld [vmem:[%s4 + $0x10] sm:$0xff]
        %v432 = vld [vmem:[%s4 + $0x18] sm:$0xff]
        %v433 = vld [vmem:[%s4 + $0x20] sm:$0xff]
        %v434 = vld [vmem:[%s4 + $0x28] sm:$0xff]
        %v435 = vld [vmem:[%s4 + $0x30] sm:$0xff]
        %v436 = vld [vmem:[%s4 + $0x38] sm:$0xff]
        %v437 = vld [vmem:[%s4 + $0x40] sm:$0xff]
        %v438 = vld [vmem:[%s4 + $0x48] sm:$0xff]
        %v439 = vld [vmem:[%s4 + $0x50] sm:$0xff]
        %v440 = vld [vmem:[%s4 + $0x58] sm:$0xff]
        %v441 = vld [vmem:[%s4 + $0x60] sm:$0xff]
        %v442 = vld [vmem:[%s4 + $0x68] sm:$0xff]
        %v443 = vld [vmem:[%s4 + $0x70] sm:$0xff]
        %v444 = vld [vmem:[%s4 + $0x78] sm:$0xff]
        %vm445 = vcmask 64512
        %v447 = vsel %vm445, %v413, 0
        %v450 = vsel %vm445, %v414, 0
        %v453 = vsel %vm445, %v415, 0
        %v456 = vsel %vm445, %v416, 0
        %v459 = vsel %vm445, %v417, 0
        %v462 = vsel %vm445, %v418, 0
        %v465 = vsel %vm445, %v419, 0
        %v468 = vsel %vm445, %v420, 0
        %v471 = vsel %vm445, %v421, 0
        %v474 = vsel %vm445, %v422, 0
        %v477 = vsel %vm445, %v423, 0
        %v480 = vsel %vm445, %v424, 0
        %v483 = vsel %vm445, %v425, 0
        %v486 = vsel %vm445, %v426, 0
        %v489 = vsel %vm445, %v427, 0
        %v492 = vsel %vm445, %v428, 0
        %494 = vmatprep.subr.mxu0 0.0
        %495 = vmatpush1.msra.mxu0 0.0
        %496 = vmatprep.subr.mxu0 0.0
        %497 = vmatpush1.msra.mxu0 0.0
        %498 = vmatprep.subr.mxu0 0.0
        %499 = vmatpush1.msra.mxu0 0.0
        %500 = vmatprep.subr.mxu0 0.0
        %501 = vmatpush1.msra.mxu0 0.0
        %502 = vmatprep.subr.mxu0 0.0
        %503 = vmatpush1.msra.mxu0 0.0
        %504 = vmatprep.subr.mxu0 0.0
        %505 = vmatpush1.msra.mxu0 0.0
        %506 = vmatprep.subr.mxu0 0.0
        %507 = vmatpush1.msra.mxu0 0.0
        %508 = vmatprep.subr.mxu0 0.0
        %509 = vmatpush1.msra.mxu0 0.0
        %510 = vmatprep.subr.mxu0 0.0
        %511 = vmatpush1.msra.mxu0 0.0
        %512 = vmatprep.subr.mxu0 0.0
        %513 = vmatpush1.msra.mxu0 0.0
        %514 = vmatprep.subr.mxu0 0.0
        %515 = vmatpush1.msra.mxu0 0.0
        %516 = vmatprep.subr.mxu0 0.0
        %517 = vmatpush1.msra.mxu0 0.0
        %518 = vmatprep.subr.mxu0 0.0
        %519 = vmatpush1.msra.mxu0 0.0
        %520 = vmatprep.subr.mxu0 0.0
        %521 = vmatpush1.msra.mxu0 0.0
        %522 = vmatprep.subr.mxu0 0.0
        %523 = vmatpush1.msra.mxu0 0.0
        %524 = vmatprep.subr.mxu0 0.0
        %525 = vmatpush1.msra.mxu0 %v412
        %526 = vmatprep.subr.mxu0 0.0
        %527 = vmatpush2.msra.mxu0 0.0
        %528 = vmatprep.subr.mxu0 0.0
        %529 = vmatpush2.msra.mxu0 0.0
        %530 = vmatprep.subr.mxu0 0.0
        %531 = vmatpush2.msra.mxu0 0.0
        %532 = vmatprep.subr.mxu0 0.0
        %533 = vmatpush2.msra.mxu0 0.0
        %534 = vmatprep.subr.mxu0 0.0
        %535 = vmatpush2.msra.mxu0 0.0
        %536 = vmatprep.subr.mxu0 0.0
        %537 = vmatpush2.msra.mxu0 0.0
        %538 = vmatprep.subr.mxu0 0.0
        %539 = vmatpush2.msra.mxu0 0.0
        %540 = vmatprep.subr.mxu0 0.0
        %541 = vmatpush2.msra.mxu0 0.0
        %542 = vmatprep.subr.mxu0 0.0
        %543 = vmatpush2.msra.mxu0 0.0
        %544 = vmatprep.subr.mxu0 0.0
        %545 = vmatpush2.msra.mxu0 0.0
        %546 = vmatprep.subr.mxu0 0.0
        %547 = vmatpush2.msra.mxu0 0.0
        %548 = vmatprep.subr.mxu0 0.0
        %549 = vmatpush2.msra.mxu0 0.0
        %550 = vmatprep.subr.mxu0 0.0
        %551 = vmatpush2.msra.mxu0 0.0
        %552 = vmatprep.subr.mxu0 0.0
        %553 = vmatpush2.msra.mxu0 0.0
        %554 = vmatprep.subr.mxu0 0.0
        %555 = vmatpush2.msra.mxu0 0.0
        %556 = vmatprep.subr.mxu0 0.0
        %557 = vmatpush2.msra.mxu0 0.0
        %558 = vmatprep.mubr.f32.mxu0 0.0
        %559 = vmatmul.mubr.f32.gmra.mxu0 %v447
        %v560 = vpop.f32.mrf.mxu0
        %v561 = vadd.f32 %v429, %v560
        %v562 = vpop.f32.mrf.mxu0
        %563 = vmatprep.mubr.f32.mxu0 0.0
        %564 = vmatmul.mubr.f32.gmra.mxu0 %v450
        %v565 = vpop.f32.mrf.mxu0
        %v566 = vadd.f32 %v430, %v565
        %v567 = vpop.f32.mrf.mxu0
        %568 = vmatprep.mubr.f32.mxu0 0.0
        %569 = vmatmul.mubr.f32.gmra.mxu0 %v453
        %v570 = vpop.f32.mrf.mxu0
        %v571 = vadd.f32 %v431, %v570
        %v572 = vpop.f32.mrf.mxu0
        %573 = vmatprep.mubr.f32.mxu0 0.0
        %574 = vmatmul.mubr.f32.gmra.mxu0 %v456
        %v575 = vpop.f32.mrf.mxu0
        %v576 = vadd.f32 %v432, %v575
        %v577 = vpop.f32.mrf.mxu0
        %578 = vmatprep.mubr.f32.mxu0 0.0
        %579 = vmatmul.mubr.f32.gmra.mxu0 %v459
        %v580 = vpop.f32.mrf.mxu0
        %v581 = vadd.f32 %v433, %v580
        %v582 = vpop.f32.mrf.mxu0
        %583 = vmatprep.mubr.f32.mxu0 0.0
        %584 = vmatmul.mubr.f32.gmra.mxu0 %v462
        %v585 = vpop.f32.mrf.mxu0
        %v586 = vadd.f32 %v434, %v585
        %v587 = vpop.f32.mrf.mxu0
        %588 = vmatprep.mubr.f32.mxu0 0.0
        %589 = vmatmul.mubr.f32.gmra.mxu0 %v465
        %v590 = vpop.f32.mrf.mxu0
        %v591 = vadd.f32 %v435, %v590
        %v592 = vpop.f32.mrf.mxu0
        %593 = vmatprep.mubr.f32.mxu0 0.0
        %594 = vmatmul.mubr.f32.gmra.mxu0 %v468
        %v595 = vpop.f32.mrf.mxu0
        %v596 = vadd.f32 %v436, %v595
        %v597 = vpop.f32.mrf.mxu0
        %598 = vmatprep.mubr.f32.mxu0 0.0
        %599 = vmatmul.mubr.f32.gmra.mxu0 %v471
        %v600 = vpop.f32.mrf.mxu0
        %v601 = vadd.f32 %v437, %v600
        %v602 = vpop.f32.mrf.mxu0
        %603 = vmatprep.mubr.f32.mxu0 0.0
        %604 = vmatmul.mubr.f32.gmra.mxu0 %v474
        %v605 = vpop.f32.mrf.mxu0
        %v606 = vadd.f32 %v438, %v605
        %v607 = vpop.f32.mrf.mxu0
        %608 = vmatprep.mubr.f32.mxu0 0.0
        %609 = vmatmul.mubr.f32.gmra.mxu0 %v477
        %v610 = vpop.f32.mrf.mxu0
        %v611 = vadd.f32 %v439, %v610
        %v612 = vpop.f32.mrf.mxu0
        %613 = vmatprep.mubr.f32.mxu0 0.0
        %614 = vmatmul.mubr.f32.gmra.mxu0 %v480
        %v615 = vpop.f32.mrf.mxu0
        %v616 = vadd.f32 %v440, %v615
        %v617 = vpop.f32.mrf.mxu0
        %618 = vmatprep.mubr.f32.mxu0 0.0
        %619 = vmatmul.mubr.f32.gmra.mxu0 %v483
        %v620 = vpop.f32.mrf.mxu0
        %v621 = vadd.f32 %v441, %v620
        %v622 = vpop.f32.mrf.mxu0
        %623 = vmatprep.mubr.f32.mxu0 0.0
        %624 = vmatmul.mubr.f32.gmra.mxu0 %v486
        %v625 = vpop.f32.mrf.mxu0
        %v626 = vadd.f32 %v442, %v625
        %v627 = vpop.f32.mrf.mxu0
        %628 = vmatprep.mubr.f32.mxu0 0.0
        %629 = vmatmul.mubr.f32.gmra.mxu0 %v489
        %v630 = vpop.f32.mrf.mxu0
        %v631 = vadd.f32 %v443, %v630
        %v632 = vpop.f32.mrf.mxu0
        %633 = vmatprep.mubr.f32.mxu0 0.0
        %634 = vmatmul.mubr.f32.gmra.mxu0 %v492
        %v635 = vpop.f32.mrf.mxu0
        %v636 = vadd.f32 %v444, %v635
        %v637 = vpop.f32.mrf.mxu0
        %638 = vdwg.mxu0
        %v639 = vsub.f32 0.0, %v561
        %v640 = vsub.f32 0.0, %v566
        %v641 = vsub.f32 0.0, %v571
        %v642 = vsub.f32 0.0, %v576
        %v643 = vsub.f32 0.0, %v581
        %v644 = vsub.f32 0.0, %v586
        %v645 = vsub.f32 0.0, %v591
        %v646 = vsub.f32 0.0, %v596
        %v647 = vsub.f32 0.0, %v601
        %v648 = vsub.f32 0.0, %v606
        %v649 = vsub.f32 0.0, %v611
        %v650 = vsub.f32 0.0, %v616
        %v651 = vsub.f32 0.0, %v621
        %v652 = vsub.f32 0.0, %v626
        %v653 = vsub.f32 0.0, %v631
        %v654 = vsub.f32 0.0, %v636
        %v655 = vmul.f32 %v639, 1.442695
        %v656 = vpow.pop %v655
        %v657 = vmul.f32 %v640, 1.442695
        %v658 = vpow.pop %v657
        %v659 = vmul.f32 %v641, 1.442695
        %v660 = vpow.pop %v659
        %v661 = vmul.f32 %v642, 1.442695
        %v662 = vpow.pop %v661
        %v663 = vmul.f32 %v643, 1.442695
        %v664 = vpow.pop %v663
        %v665 = vmul.f32 %v644, 1.442695
        %v666 = vpow.pop %v665
        %v667 = vmul.f32 %v645, 1.442695
        %v668 = vpow.pop %v667
        %v669 = vmul.f32 %v646, 1.442695
        %v670 = vpow.pop %v669
        %v671 = vmul.f32 %v647, 1.442695
        %v672 = vpow.pop %v671
        %v673 = vmul.f32 %v648, 1.442695
        %v674 = vpow.pop %v673
        %v675 = vmul.f32 %v649, 1.442695
        %v676 = vpow.pop %v675
        %v677 = vmul.f32 %v650, 1.442695
        %v678 = vpow.pop %v677
        %v679 = vmul.f32 %v651, 1.442695
        %v680 = vpow.pop %v679
        %v681 = vmul.f32 %v652, 1.442695
        %v682 = vpow.pop %v681
        %v683 = vmul.f32 %v653, 1.442695
        %v684 = vpow.pop %v683
        %v685 = vmul.f32 %v654, 1.442695
        %v686 = vpow.pop %v685
        %v687 = vadd.f32 %v656, 1.0
        %v688 = vadd.f32 %v658, 1.0
        %v689 = vadd.f32 %v660, 1.0
        %v690 = vadd.f32 %v662, 1.0
        %v691 = vadd.f32 %v664, 1.0
        %v692 = vadd.f32 %v666, 1.0
        %v693 = vadd.f32 %v668, 1.0
        %v694 = vadd.f32 %v670, 1.0
        %v695 = vadd.f32 %v672, 1.0
        %v696 = vadd.f32 %v674, 1.0
        %v697 = vadd.f32 %v676, 1.0
        %v698 = vadd.f32 %v678, 1.0
        %v699 = vadd.f32 %v680, 1.0
        %v700 = vadd.f32 %v682, 1.0
        %v701 = vadd.f32 %v684, 1.0
        %v702 = vadd.f32 %v686, 1.0
        %v703 = vrcp.pop %v687
        %v704 = vmul.f32 1.0, %v703
        %v705 = vrcp.pop %v688
        %v706 = vmul.f32 1.0, %v705
        %v707 = vrcp.pop %v689
        %v708 = vmul.f32 1.0, %v707
        %v709 = vrcp.pop %v690
        %v710 = vmul.f32 1.0, %v709
        %v711 = vrcp.pop %v691
        %v712 = vmul.f32 1.0, %v711
        %v713 = vrcp.pop %v692
        %v714 = vmul.f32 1.0, %v713
        %v715 = vrcp.pop %v693
        %v716 = vmul.f32 1.0, %v715
        %v717 = vrcp.pop %v694
        %v718 = vmul.f32 1.0, %v717
        %v719 = vrcp.pop %v695
        %v720 = vmul.f32 1.0, %v719
        %v721 = vrcp.pop %v696
        %v722 = vmul.f32 1.0, %v721
        %v723 = vrcp.pop %v697
        %v724 = vmul.f32 1.0, %v723
        %v725 = vrcp.pop %v698
        %v726 = vmul.f32 1.0, %v725
        %v727 = vrcp.pop %v699
        %v728 = vmul.f32 1.0, %v727
        %v729 = vrcp.pop %v700
        %v730 = vmul.f32 1.0, %v729
        %v731 = vrcp.pop %v701
        %v732 = vmul.f32 1.0, %v731
        %v733 = vrcp.pop %v702
        %v734 = vmul.f32 1.0, %v733
        %736 = vset.pattern.permute.xlu0 0
        %737 = vperm.xlu0 %736, %v704
        %v738 = vpop.permute.xlu0 %737
        %741 = vset.pattern.permute.xlu0 0
        %742 = vperm.xlu0 %741, %v706
        %v743 = vpop.permute.xlu0 %742
        %746 = vset.pattern.permute.xlu0 0
        %747 = vperm.xlu0 %746, %v708
        %v748 = vpop.permute.xlu0 %747
        %751 = vset.pattern.permute.xlu0 0
        %752 = vperm.xlu0 %751, %v710
        %v753 = vpop.permute.xlu0 %752
        %756 = vset.pattern.permute.xlu0 0
        %757 = vperm.xlu0 %756, %v712
        %v758 = vpop.permute.xlu0 %757
        %761 = vset.pattern.permute.xlu0 0
        %762 = vperm.xlu0 %761, %v714
        %v763 = vpop.permute.xlu0 %762
        %766 = vset.pattern.permute.xlu0 0
        %767 = vperm.xlu0 %766, %v716
        %v768 = vpop.permute.xlu0 %767
        %771 = vset.pattern.permute.xlu0 0
        %772 = vperm.xlu0 %771, %v718
        %v773 = vpop.permute.xlu0 %772
        %776 = vset.pattern.permute.xlu0 0
        %777 = vperm.xlu0 %776, %v720
        %v778 = vpop.permute.xlu0 %777
        %781 = vset.pattern.permute.xlu0 0
        %782 = vperm.xlu0 %781, %v722
        %v783 = vpop.permute.xlu0 %782
        %786 = vset.pattern.permute.xlu0 0
        %787 = vperm.xlu0 %786, %v724
        %v788 = vpop.permute.xlu0 %787
        %791 = vset.pattern.permute.xlu0 0
        %792 = vperm.xlu0 %791, %v726
        %v793 = vpop.permute.xlu0 %792
        %796 = vset.pattern.permute.xlu0 0
        %797 = vperm.xlu0 %796, %v728
        %v798 = vpop.permute.xlu0 %797
        %801 = vset.pattern.permute.xlu0 0
        %802 = vperm.xlu0 %801, %v730
        %v803 = vpop.permute.xlu0 %802
        %806 = vset.pattern.permute.xlu0 0
        %807 = vperm.xlu0 %806, %v732
        %v808 = vpop.permute.xlu0 %807
        %811 = vset.pattern.permute.xlu0 0
        %812 = vperm.xlu0 %811, %v734
        %v813 = vpop.permute.xlu0 %812
        %v815 = vmul.f32 %v243, %v738
        %v816 = vmul.f32 %v244, %v738
        %v817 = vmul.f32 %v245, %v743
        %v818 = vmul.f32 %v246, %v743
        %v819 = vmul.f32 %v247, %v748
        %v820 = vmul.f32 %v248, %v748
        %v821 = vmul.f32 %v249, %v753
        %v822 = vmul.f32 %v250, %v753
        %v823 = vmul.f32 %v251, %v758
        %v824 = vmul.f32 %v252, %v758
        %v825 = vmul.f32 %v253, %v763
        %v826 = vmul.f32 %v254, %v763
        %v827 = vmul.f32 %v255, %v768
        %v828 = vmul.f32 %v256, %v768
        %v829 = vmul.f32 %v257, %v773
        %v830 = vmul.f32 %v258, %v773
        %v831 = vmul.f32 %v259, %v778
        %v832 = vmul.f32 %v260, %v778
        %v833 = vmul.f32 %v261, %v783
        %v834 = vmul.f32 %v262, %v783
        %v835 = vmul.f32 %v263, %v788
        %v836 = vmul.f32 %v264, %v788
        %v837 = vmul.f32 %v265, %v793
        %v838 = vmul.f32 %v266, %v793
        %v839 = vmul.f32 %v267, %v798
        %v840 = vmul.f32 %v268, %v798
        %v841 = vmul.f32 %v269, %v803
        %v842 = vmul.f32 %v270, %v803
        %v843 = vmul.f32 %v271, %v808
        %v844 = vmul.f32 %v272, %v808
        %v845 = vmul.f32 %v273, %v813
        %v846 = vmul.f32 %v274, %v813
        %847 = vst [vmem:[%s242] sm:$0xff] %v815
        %848 = vst [vmem:[%s242 + $0x8] sm:$0xff] %v816
        %849 = vst [vmem:[%s242 + $0x10] sm:$0xff] %v817
        %850 = vst [vmem:[%s242 + $0x18] sm:$0xff] %v818
        %851 = vst [vmem:[%s242 + $0x20] sm:$0xff] %v819
        %852 = vst [vmem:[%s242 + $0x28] sm:$0xff] %v820
        %853 = vst [vmem:[%s242 + $0x30] sm:$0xff] %v821
        %854 = vst [vmem:[%s242 + $0x38] sm:$0xff] %v822
        %855 = vst [vmem:[%s242 + $0x40] sm:$0xff] %v823
        %856 = vst [vmem:[%s242 + $0x48] sm:$0xff] %v824
        %857 = vst [vmem:[%s242 + $0x50] sm:$0xff] %v825
        %858 = vst [vmem:[%s242 + $0x58] sm:$0xff] %v826
        %859 = vst [vmem:[%s242 + $0x60] sm:$0xff] %v827
        %860 = vst [vmem:[%s242 + $0x68] sm:$0xff] %v828
        %861 = vst [vmem:[%s242 + $0x70] sm:$0xff] %v829
        %862 = vst [vmem:[%s242 + $0x78] sm:$0xff] %v830
        %863 = vst [vmem:[%s242 + $0x80] sm:$0xff] %v831
        %864 = vst [vmem:[%s242 + $0x88] sm:$0xff] %v832
        %865 = vst [vmem:[%s242 + $0x90] sm:$0xff] %v833
        %866 = vst [vmem:[%s242 + $0x98] sm:$0xff] %v834
        %867 = vst [vmem:[%s242 + $0xa0] sm:$0xff] %v835
        %868 = vst [vmem:[%s242 + $0xa8] sm:$0xff] %v836
        %869 = vst [vmem:[%s242 + $0xb0] sm:$0xff] %v837
        %870 = vst [vmem:[%s242 + $0xb8] sm:$0xff] %v838
        %871 = vst [vmem:[%s242 + $0xc0] sm:$0xff] %v839
        %872 = vst [vmem:[%s242 + $0xc8] sm:$0xff] %v840
        %873 = vst [vmem:[%s242 + $0xd0] sm:$0xff] %v841
        %874 = vst [vmem:[%s242 + $0xd8] sm:$0xff] %v842
        %875 = vst [vmem:[%s242 + $0xe0] sm:$0xff] %v843
        %876 = vst [vmem:[%s242 + $0xe8] sm:$0xff] %v844
        %877 = vst [vmem:[%s242 + $0xf0] sm:$0xff] %v845
        %878 = vst [vmem:[%s242 + $0xf8] sm:$0xff] %v846
        %s879 = sand.u32 %s140, 1
        %s880 = scalar_lea.sflag [#allocation4], %s879
        %s881 = sand.u32 %s140, 1
        %s882 = smul.addr %s881, 256
        %s883 = scalar_lea.vmem [#allocation5], %s882
        // Predicated region
        $region45: #{tpu_custom_call.1} parent=39 // pred_check
          %p884 = pneg %p150
        $region46: #{tpu_custom_call.1} parent=39 // pred_check_branch
          %886 = sbr.rel (%p884) target = $region48
        $region47: #{tpu_custom_call.1} parent=39 // pred_region
          %s888 = ssub.s32 4096, 4096
          %889 = vsyncadd %s880, %s888
          %s890 = smul.addr %s22, 32
          %s891 = smul.addr %s890, 128
          %s892 = scalar_lea.hbm %s5, %s891
          %s893 = sshll.u32 %s883, 4
          %s894 = int_to_ptr.vmem [resolvable:$true] %s893
          %899 = dma.vmem_to_hbm [thread:$0]  %s894, 4096, %s892, %s880, 256, 256, 16
        $region48: #{tpu_custom_call.1} parent=39 // pred_fallthru
          _
      $region40: #{tpu_custom_call.1} parent=5 // pred_fallthru
        _
      %p900 = scmp.le.s32.totalorder 2, %s17
      // Predicated region
      $region49: #{tpu_custom_call.1} parent=5 // pred_check
        %p901 = pneg %p900
      $region50: #{tpu_custom_call.1} parent=5 // pred_check_branch
        %903 = sbr.rel (%p901) target = $region52
      $region51: #{tpu_custom_call.1} parent=5 // pred_region
        %s904 = ssub.s32 %s17, 2
        // Predicated region
        $region53: #{tpu_custom_call.1} parent=51 // pred_check
          %p905 = pneg %p156
        $region54: #{tpu_custom_call.1} parent=51 // pred_check_branch
          %907 = sbr.rel (%p905) target = $region56
        $region55: #{tpu_custom_call.1} parent=51 // pred_region
          %s908 = sand.u32 %s141, 1
          %s909 = scalar_lea.sflag [#allocation4], %s908
          %s910 = sand.u32 %s141, 1
          %s911 = smul.addr %s910, 256
          %s912 = scalar_lea.vmem [#allocation5], %s911
          %913 = dma.done %s909, 4096
        $region56: #{tpu_custom_call.1} parent=51 // pred_fallthru
          _
      $region52: #{tpu_custom_call.1} parent=5 // pred_fallthru
        _
    $region6: #{tpu_custom_call.1} parent=1 // loop_footer
      %s21 = sadd.s32 1, %s17
    $region7: #{tpu_custom_call.1} parent=1 // loop_footer_branch
      %16 = sbr.rel target = $region3
    $region8: #{tpu_custom_call.1} parent=1 // loop_exit
      _
    %914 = vsyncpa [#allocation3], 1
    %s915 = scalar_lea.sflag [#allocation3], 1
    %916 = vsyncpa %s915, 1
    %917 = vsyncpa [#allocation4], 1
    %s918 = scalar_lea.sflag [#allocation4], 1
    %919 = vsyncpa %s918, 1

</llo_original>
